<compile_context>
chip_gen: v5e
topology: v5e:2x2
jax: 0.10.0
libtpu: 0.0.40
codegen_flags: <defaults>
</compile_context>

<pallas_src>
import jax
import jax.numpy as jnp
from jax.experimental import pallas as pl
from jax.experimental.pallas import tpu as pltpu


# --------------------------- kernels --------------------------------------- #

def _gemm_bias_kernel(x_ref, w_ref, b_ref, o_ref, acc_ref):
    # x_ref: (tm, tk)  w_ref: (tk, tn)  b_ref: (1, tn)  o_ref: (tm, tn)
    # acc_ref: (tm, tn) f32 scratch, resident across the K reduction axis.
    k = pl.program_id(2)

    @pl.when(k == 0)
    def _init():
        acc_ref[...] = jnp.zeros_like(acc_ref)

    acc_ref[...] += jnp.dot(
        x_ref[...], w_ref[...], preferred_element_type=jnp.float32
    )

    @pl.when(k == pl.num_programs(2) - 1)
    def _finalize():
        # Bias added once, after the full (cross-rank == cross-K) reduction, in f32.
        o_ref[...] = (acc_ref[...] + b_ref[...].astype(jnp.float32)).astype(
            o_ref.dtype
        )


def _gemm_kernel(x_ref, w_ref, o_ref, acc_ref):
    k = pl.program_id(2)

    @pl.when(k == 0)
    def _init():
        acc_ref[...] = jnp.zeros_like(acc_ref)

    acc_ref[...] += jnp.dot(
        x_ref[...], w_ref[...], preferred_element_type=jnp.float32
    )

    @pl.when(k == pl.num_programs(2) - 1)
    def _finalize():
        o_ref[...] = acc_ref[...].astype(o_ref.dtype)


# --------------------------- helpers ---------------------------------------- #

def _round_up(a, b):
    return (a + b - 1) // b * b


def _sublane_mult(dtype):
    # native sublane packing: 8 rows (f32), 16 (bf16), 32 (int8/fp8)
    return max(8, 32 // jnp.dtype(dtype).itemsize)


def _pick_tile(padded_dim, target, align):
    """Largest multiple of `align` that divides `padded_dim` and is <= target.
    `padded_dim` must itself be a multiple of `align`."""
    target = max(align, min(target, padded_dim))
    best = align
    t = align
    while t <= target:
        if padded_dim % t == 0:
            best = t
        t += align
    return best


def unaligned_divide(total, world_size, rank):
    """Same semantics as mindspeed's unaligned_divide: remainder spread over the
    first `total % world_size` ranks."""
    base = total // world_size
    rem = total % world_size
    return base + (1 if rank < rem else 0)


# --------------------------- module-init-time packing ----------------------- #

def pack_row_parallel_weights(weights, compute_dtype=None):
    """One-time weight repack (analogous to module __init__).

    weights: list (one per simulated TP rank) of [output_size, K_part_r], the
             unaligned K split of the master [output_size, input_size] weight.
    Returns (packed [Kp, Np] weight, K_total, N).  Packed = concatenated along K,
    transposed to [K, N], zero-padded to multiples of 128 on both dims, optionally
    cast to compute_dtype (e.g. bf16) for MXU throughput / HBM bandwidth.
    """
    N = weights[0].shape[0]
    w_full = jnp.concatenate(weights, axis=1)        # [N, K_total], rank order = K order
    K_total = w_full.shape[1]
    wt = w_full.T                                    # one-time transpose -> [K_total, N]
    if compute_dtype is not None:
        wt = wt.astype(compute_dtype)
    Kp = _round_up(K_total, 128)
    Np = _round_up(N, 128)
    packed = jnp.pad(wt, ((0, Kp - K_total), (0, Np - N)))
    return packed, K_total, N


# --------------------------- forward ---------------------------------------- #

def unaligned_row_parallel_linear_forward(
    input_,
    packed_weight,
    bias,
    *,
    output_size,
    skip_bias_add=False,
    compute_dtype=None,
    tm=256,
    tn=512,
    tk=512,
):
    """Forward of UnalignedRowParallelLinear (TP group fused into the K reduction).

    input_:        [seq, batch, input_size]   (Megatron layout, full K — i.e. the
                   concatenation of all ranks' input_parallel slices)
    packed_weight: [Kp, Np] from pack_row_parallel_weights (done once at init)
    bias:          [output_size] or None
    Returns (output, output_bias) exactly like the PyTorch module.
    """
    S, B, K_total = input_.shape
    M = S * B
    N = output_size
    Kp, Np = packed_weight.shape
    assert Kp >= K_total and Np >= N

    x2d = input_.reshape(M, K_total)
    if compute_dtype is not None:
        x2d = x2d.astype(compute_dtype)
    dtype = x2d.dtype
    out_dtype = dtype

    # ---- minimal padding + divisor-based tile selection ---------------------
    sub = _sublane_mult(dtype)
    Mp = _round_up(M, sub)

    tm_eff = _pick_tile(Mp, tm, sub)
    tn_eff = _pick_tile(Np, tn, 128)
    tk_eff = _pick_tile(Kp, tk, 128)

    # v7x megacore: make sure the parallel axes have >= 2 blocks total.
    if (Mp // tm_eff) * (Np // tn_eff) < 2:
        if Np // 128 >= 2:
            tn_eff = _pick_tile(Np, Np // 2, 128)
        elif Mp // sub >= 2:
            tm_eff = _pick_tile(Mp, Mp // 2, sub)

    # Tail-pad the activation only (<= sub-1 rows, <= 127 cols); no stacked copy.
    if Mp != M or Kp != K_total:
        x_pad = jnp.pad(x2d, ((0, Mp - M), (0, Kp - K_total)))
    else:
        x_pad = x2d

    grid = (Mp // tm_eff, Np // tn_eff, Kp // tk_eff)
    x_spec = pl.BlockSpec((tm_eff, tk_eff), lambda i, j, k: (i, k))
    w_spec = pl.BlockSpec((tk_eff, tn_eff), lambda i, j, k: (k, j))
    out_spec = pl.BlockSpec((tm_eff, tn_eff), lambda i, j, k: (i, j))
    scratch = [pltpu.VMEM((tm_eff, tn_eff), jnp.float32)]
    cparams = pltpu.CompilerParams(
        dimension_semantics=("parallel", "parallel", "arbitrary"),
        vmem_limit_bytes=64 * 1024 * 1024,
    )

    add_bias = (bias is not None) and (not skip_bias_add)
    if add_bias:
        bias_pad = jnp.zeros((1, Np), dtype=jnp.float32).at[0, :N].set(
            bias.astype(jnp.float32)
        )
        out_padded = pl.pallas_call(
            _gemm_bias_kernel,
            out_shape=jax.ShapeDtypeStruct((Mp, Np), out_dtype),
            grid_spec=pltpu.PrefetchScalarGridSpec(
                num_scalar_prefetch=0,
                grid=grid,
                in_specs=[
                    x_spec,
                    w_spec,
                    pl.BlockSpec((1, tn_eff), lambda i, j, k: (0, j)),
                ],
                out_specs=out_spec,
                scratch_shapes=scratch,
            ),
            compiler_params=cparams,
        )(x_pad, packed_weight, bias_pad)
    else:
        out_padded = pl.pallas_call(
            _gemm_kernel,
            out_shape=jax.ShapeDtypeStruct((Mp, Np), out_dtype),
            grid_spec=pltpu.PrefetchScalarGridSpec(
                num_scalar_prefetch=0,
                grid=grid,
                in_specs=[x_spec, w_spec],
                out_specs=out_spec,
                scratch_shapes=scratch,
            ),
            compiler_params=cparams,
        )(x_pad, packed_weight)

    output_ = out_padded[:M, :N].reshape(S, B, N)

    if not skip_bias_add:
        output = output_        # bias (if any) already fused at finalize
        output_bias = None
    else:
        output = output_
        output_bias = bias
    return output, output_bias


# --------------------------- tests ------------------------------------------ #

if __name__ == "__main__":
    # ---- Test 1: nonzero bias, skip_bias_add=False, unaligned K split 144/112 ----
    seq, batch = 8, 2
    input_size, output_size = 256, 256
    world_size = 2  # simulated tensor-parallel group

    key = jax.random.PRNGKey(0)
    k_x, k_w, k_b = jax.random.split(key, 3)

    x = jax.random.normal(k_x, (seq, batch, input_size), dtype=jnp.float32)

    base_parts = [unaligned_divide(input_size, world_size, r) for r in range(world_size)]
    base_parts = [base_parts[0] + 16, base_parts[1] - 16]  # 144 / 112
    assert sum(base_parts) == input_size

    master_weight = (
        jax.random.normal(k_w, (output_size, input_size), dtype=jnp.float32) * 0.02
    )
    weights, used = [], 0
    for k_r in base_parts:
        weights.append(
            jax.lax.dynamic_slice(master_weight, (0, used), (output_size, k_r))
        )
        used += k_r

    bias = jax.random.normal(k_b, (output_size,), dtype=jnp.float32) * 0.1

    # one-time (module init) weight pack
    packed_w, _, _ = pack_row_parallel_weights(weights)

    out, out_bias = unaligned_row_parallel_linear_forward(
        x, packed_w, bias, output_size=output_size, skip_bias_add=False
    )
    out = jax.block_until_ready(out)

    ref = jnp.einsum("sbk,nk->sbn", x, master_weight) + bias
    assert out.shape == (seq, batch, output_size)
    assert out_bias is None
    assert jnp.allclose(out, ref, atol=1e-3, rtol=1e-3)

    # ---- Test 2: non-tile-aligned M/N/K, skip_bias_add=True (bias returned raw) ----
    seq2, batch2, in2, out2 = 5, 2, 200, 192  # M=10, N=192, K=200, split 104/96
    k_x2, k_w2 = jax.random.split(jax.random.PRNGKey(1))
    x2 = jax.random.normal(k_x2, (seq2, batch2, in2), dtype=jnp.float32)
    mw2 = jax.random.normal(k_w2, (out2, in2), dtype=jnp.float32) * 0.02
    parts2 = [104, 96]
    weights2, used = [], 0
    for k_r in parts2:
        weights2.append(jax.lax.dynamic_slice(mw2, (0, used), (out2, k_r)))
        used += k_r
    bias2 = jax.random.normal(jax.random.PRNGKey(2), (out2,), dtype=jnp.float32) * 0.1

    packed_w2, _, _ = pack_row_parallel_weights(weights2)
    y2, y2_bias = unaligned_row_parallel_linear_forward(
        x2, packed_w2, bias2, output_size=out2, skip_bias_add=True
    )
    y2 = jax.block_until_ready(y2)
    ref2 = jnp.einsum("sbk,nk->sbn", x2, mw2)  # skip_bias_add: no bias in output
    assert y2.shape == (seq2, batch2, out2)
    assert y2_bias is bias2
    assert jnp.allclose(y2, ref2, atol=1e-3, rtol=1e-3)

    # ---- Test 3: bias=None (specialized no-bias kernel path) ----
    y3, y3_bias = unaligned_row_parallel_linear_forward(
        x, packed_w, None, output_size=output_size, skip_bias_add=False
    )
    y3 = jax.block_until_ready(y3)
    ref3 = jnp.einsum("sbk,nk->sbn", x, master_weight)
    assert y3_bias is None
    assert jnp.allclose(y3, ref3, atol=1e-3, rtol=1e-3)

    # ---- Test 4: bf16 operands, f32 accumulation (loose tolerance) ----
    packed_w_bf16, _, _ = pack_row_parallel_weights(weights, compute_dtype=jnp.bfloat16)
    y4, _ = unaligned_row_parallel_linear_forward(
        x, packed_w_bf16, bias, output_size=output_size,
        skip_bias_add=False, compute_dtype=jnp.bfloat16,
    )
    y4 = jax.block_until_ready(y4)
    assert y4.dtype == jnp.bfloat16
    assert jnp.allclose(y4.astype(jnp.float32), ref, atol=5e-2, rtol=5e-2)

    print("KERNEL_OK")
</pallas_src>

<mosaic_0001>
module attributes {stable_mosaic.version = 11 : i64} {
  func.func @_gemm_bias_kernel(%arg0: i32, %arg1: i32, %arg2: i32, %arg3: memref<16x256xf32, #tpu.memory_space<vmem>>, %arg4: memref<256x128xf32, #tpu.memory_space<vmem>>, %arg5: memref<1x128xf32, #tpu.memory_space<vmem>>, %arg6: memref<16x128xf32, #tpu.memory_space<vmem>>, %arg7: memref<16x128xf32, #tpu.memory_space<vmem>>) attributes {dimension_semantics = [#tpu.dimension_semantics<parallel>, #tpu.dimension_semantics<parallel>, #tpu.dimension_semantics<arbitrary>], iteration_bounds = array<i64: 1, 2, 1>, scalar_prefetch = 0 : i64, scratch_operands = 1 : i64, tpu.core_type = #tpu.core_type<tc>, window_params = [{transform_indices = @transform_0, window_bounds = array<i64: 16, 256>}, {transform_indices = @transform_1, window_bounds = array<i64: 256, 128>}, {transform_indices = @transform_2, window_bounds = array<i64: 1, 128>}, {transform_indices = @transform_3, window_bounds = array<i64: 16, 128>}]} {
    %c0_i32 = arith.constant 0 : i32
    %0 = arith.cmpi eq, %arg2, %c0_i32 : i32
    %1 = arith.extui %0 : i1 to i32
    %c0_i32_0 = arith.constant 0 : i32
    %2 = arith.cmpi ne, %1, %c0_i32_0 : i32
    scf.if %2 {
      %cst_10 = arith.constant 0.000000e+00 : f32
      %12 = vector.broadcast %cst_10 : f32 to vector<16x128xf32>
      %c0_11 = arith.constant 0 : index
      %c0_12 = arith.constant 0 : index
      %13 = vector.load %arg7[%c0_11, %c0_12] : memref<16x128xf32, #tpu.memory_space<vmem>>, vector<16x128xf32>
      tpu.vector_store %arg7[%c0_11, %c0_12], %12 {strides = array<i32>} : memref<16x128xf32, #tpu.memory_space<vmem>>, vector<16x128xf32>,
    } else {
    }
    %c0 = arith.constant 0 : index
    %c0_1 = arith.constant 0 : index
    %3 = vector.load %arg7[%c0, %c0_1] : memref<16x128xf32, #tpu.memory_space<vmem>>, vector<16x128xf32>
    %c0_2 = arith.constant 0 : index
    %c0_3 = arith.constant 0 : index
    %4 = vector.load %arg3[%c0_2, %c0_3] : memref<16x256xf32, #tpu.memory_space<vmem>>, vector<16x256xf32>
    %c0_4 = arith.constant 0 : index
    %c0_5 = arith.constant 0 : index
    %5 = vector.load %arg4[%c0_4, %c0_5] : memref<256x128xf32, #tpu.memory_space<vmem>>, vector<256x128xf32>
    %cst = arith.constant dense<0.000000e+00> : vector<16x128xf32>
    %6 = tpu.matmul %4, %5, %cst {dimension_numbers = #tpu.dot_dimension_numbers<[1], [0], [0], [1], [0, 0, 1, 1], [], []>} : vector<16x256xf32>, vector<256x128xf32>, vector<16x128xf32> -> vector<16x128xf32>
    %7 = arith.addf %3, %6 : vector<16x128xf32>
    %c0_6 = arith.constant 0 : index
    %c0_7 = arith.constant 0 : index
    %8 = vector.load %arg7[%c0_6, %c0_7] : memref<16x128xf32, #tpu.memory_space<vmem>>, vector<16x128xf32>
    tpu.vector_store %arg7[%c0_6, %c0_7], %7 {strides = array<i32>} : memref<16x128xf32, #tpu.memory_space<vmem>>, vector<16x128xf32>,
    %c0_i32_8 = arith.constant 0 : i32
    %9 = arith.cmpi eq, %arg2, %c0_i32_8 : i32
    %10 = arith.extui %9 : i1 to i32
    %c0_i32_9 = arith.constant 0 : i32
    %11 = arith.cmpi ne, %10, %c0_i32_9 : i32
    scf.if %11 {
      %c0_10 = arith.constant 0 : index
      %c0_11 = arith.constant 0 : index
      %12 = vector.load %arg7[%c0_10, %c0_11] : memref<16x128xf32, #tpu.memory_space<vmem>>, vector<16x128xf32>
      %c0_12 = arith.constant 0 : index
      %c0_13 = arith.constant 0 : index
      %13 = vector.load %arg5[%c0_12, %c0_13] : memref<1x128xf32, #tpu.memory_space<vmem>>, vector<1x128xf32>
      %14 = vector.broadcast %13 : vector<1x128xf32> to vector<16x128xf32>
      %15 = arith.addf %12, %14 : vector<16x128xf32>
      %c0_14 = arith.constant 0 : index
      %c0_15 = arith.constant 0 : index
      %16 = vector.load %arg6[%c0_14, %c0_15] : memref<16x128xf32, #tpu.memory_space<vmem>>, vector<16x128xf32>
      tpu.vector_store %arg6[%c0_14, %c0_15], %15 {strides = array<i32>} : memref<16x128xf32, #tpu.memory_space<vmem>>, vector<16x128xf32>,
    } else {
    }
    return
  }
  func.func @transform_0(%arg0: i32, %arg1: i32, %arg2: i32) -> (i32, i32) {
    %c0_i32 = arith.constant 0 : i32
    return %arg0, %arg2 : i32, i32
  }
  func.func @transform_1(%arg0: i32, %arg1: i32, %arg2: i32) -> (i32, i32) {
    %c0_i32 = arith.constant 0 : i32
    return %arg2, %arg1 : i32, i32
  }
  func.func @transform_2(%arg0: i32, %arg1: i32, %arg2: i32) -> (i32, i32) {
    %c0_i32 = arith.constant 0 : i32
    %c0_i32_0 = arith.constant 0 : i32
    return %c0_i32, %arg1 : i32, i32
  }
  func.func @transform_3(%arg0: i32, %arg1: i32, %arg2: i32) -> (i32, i32) {
    %c0_i32 = arith.constant 0 : i32
    return %arg0, %arg1 : i32, i32
  }
}

</mosaic_0001>

<llo_original>
// kernel: tpu_custom_call.1
$region0: #{tpu_custom_call.1}
  #allocation0 [shape = 'u32[]', space=smem, size = 0x4, offset = 0x4, fixed_abs, tag = 'smem constant byte address 0x4 - core index']
  #allocation1 [shape = 'u32[72,128]{1,0:T(1,128)}', space=vmem, size = 0x9000, scoped, tag = 'internal scratch']
  #allocation2 [shape = 'f32[16,128]{1,0:T(8,128)}', space=vmem, size = 0x2000, scoped, tag = 'scratch operand']
  %s0 = inlined_call_operand.hbm [shape: f32[16,256], index: 0, kind: input, shape index: {}]
  %s1 = inlined_call_operand.hbm [shape: f32[256,256], index: 1, kind: input, shape index: {}]
  %s2 = inlined_call_operand.hbm [shape: f32[1,256], index: 2, kind: input, shape index: {}]
  %s3 = inlined_call_operand.hbm [shape: f32[16,256], index: 3, kind: output, shape index: {}]
  %s4 = sld [smem:[#allocation0]]
  $region65: #{tpu_custom_call.1} parent=0
    _
  %s6 = ssub.s32 1, %s4
  %s7 = scalar_select 0, %s6, %s4
  $region1: #{tpu_custom_call.1} parent=0
    #allocation3 [shape = 'u8[16384]{0}', space=vmem, size = 0x4000, scoped, tag = 'input window, operand 0, single buffered']
    #allocation4 [shape = 's32[2]{0}', space=sflag, size = 0x8, scoped, tag = 'scoped memory for tpu_custom_call.1']
    #allocation5 [shape = 's32[2]{0}', space=sflag, size = 0x8, scoped, tag = 'scoped memory for tpu_custom_call.1']
    #allocation6 [shape = 'u8[262144]{0}', space=vmem, size = 0x40000, scoped, tag = 'input window, operand 1']
    #allocation7 [shape = 's32[2]{0}', space=sflag, size = 0x8, scoped, tag = 'scoped memory for tpu_custom_call.1']
    #allocation8 [shape = 'u8[1024]{0}', space=vmem, size = 0x400, scoped, tag = 'input window, operand 2']
    #allocation9 [shape = 'u8[16384]{0}', space=vmem, size = 0x4000, scoped, tag = 'output window, operand 0']
    %8 = vsyncpa [#allocation4], 0
    %9 = vsyncpa [#allocation7], 0
    %s10 = scalar_lea.sflag [#allocation7], 1
    %11 = vsyncpa %s10, 0
    %12 = vsyncpa [#allocation5], 0
    %s13 = scalar_lea.sflag [#allocation5], 1
    %14 = vsyncpa %s13, 0
    loop: start=0, step=1, limit=4
    $region2: #{tpu_custom_call.1} parent=1 // loop_pre_header
      _
    $region3: #{tpu_custom_call.1} parent=1 // loop_header
      %s16 = sphi 0, %s20
      %p17 = scmp.ge.s32.totalorder %s16, 4
      %s23 = sphi 0, %s42
      %s24 = sphi 0, %s38
      %s25 = sphi 0, %s34
      %s26 = sphi 0, %s23
      %s27 = sphi 0, %s24
      %s28 = sphi 0, %s25
      %s29 = sphi 0, %s26
      %s30 = sphi 0, %s27
      %s31 = sphi 0, %s28
      %s47 = sphi 0, %s49
      %s50 = sphi 0, %s47
      %s51 = sphi 0, %s50
      %s67 = sphi 0, %s51
      %s75 = sphi 0, %s77
      %s78 = sphi 0, %s75
      %s79 = sphi 0, %s78
      %s95 = sphi 0, %s79
      %s101 = sphi 0, %s103
      %s104 = sphi 0, %s101
      %s105 = sphi 0, %s104
      %s121 = sphi 0, %s105
      %s129 = sphi 0, %s131
      %s132 = sphi 0, %s129
      %s133 = sphi 0, %s132
      %s149 = sphi 0, %s133
    $region4: #{tpu_custom_call.1} parent=1 // loop_header_branch
      %19 = sbr.rel (%p17) target = $region8
    $region5: #{tpu_custom_call.1} parent=1 // loop_body
      %s21 = ssub.s32 %s16, 1
      %s22 = ssub.s32 %s16, 2
      %s32 = sadd.s32 1, %s25
      %p33 = scmp.ge.s32.totalorder %s32, 1
      %s34 = scalar_select %p33, 0, %s32
      %s35 = sadd.s32 1, %s24
      %s36 = scalar_select %p33, %s35, %s24
      %p37 = scmp.ge.s32.totalorder %s36, 2
      %s38 = scalar_select %p37, 0, %s36
      %s39 = sadd.s32 1, %s23
      %s40 = scalar_select %p37, %s39, %s23
      %p41 = scmp.ge.s32.totalorder %s40, 1
      %s42 = scalar_select %p41, 0, %s40
      %s43 = ssub.s32 %s23, %s42
      %s44 = ssub.s32 %s25, %s34
      %s45 = sor.u32 %s43, %s44
      %p46 = scmp.eq.s32.totalorder %s45, 0
      %s48 = sadd.s32 %s47, 1
      %s49 = scalar_select %p46, %s47, %s48
      %p52 = pneg %p46
      %p53 = scmp.eq.s32.totalorder %s16, 1
      %p54 = por %p52, %p53
      %p55 = scmp.ne.s32.totalorder %s47, %s50
      %p56 = scmp.eq.s32.totalorder %s16, 0
      %p57 = por %p55, %p56
      %p58 = scmp.ne.s32.totalorder %s47, %s50
      %p59 = scmp.eq.s32.totalorder %s21, 1
      %p60 = por %p58, %p59
      %p61 = scmp.ne.s32.totalorder %s50, %s51
      %p62 = scmp.eq.s32.totalorder %s21, 0
      %p63 = por %p61, %p62
      %p64 = scmp.ne.s32.totalorder %s50, %s51
      %p65 = scmp.eq.s32.totalorder %s22, 1
      %p66 = por %p64, %p65
      %p68 = scmp.ne.s32.totalorder %s51, %s67
      %p69 = scmp.eq.s32.totalorder %s22, 0
      %p70 = por %p68, %p69
      %s71 = ssub.s32 %s25, %s34
      %s72 = ssub.s32 %s24, %s38
      %s73 = sor.u32 %s71, %s72
      %p74 = scmp.eq.s32.totalorder %s73, 0
      %s76 = sadd.s32 %s75, 1
      %s77 = scalar_select %p74, %s75, %s76
      %p80 = pneg %p74
      %p81 = scmp.eq.s32.totalorder %s16, 1
      %p82 = por %p80, %p81
      %p83 = scmp.ne.s32.totalorder %s75, %s78
      %p84 = scmp.eq.s32.totalorder %s16, 0
      %p85 = por %p83, %p84
      %p86 = scmp.ne.s32.totalorder %s75, %s78
      %p87 = scmp.eq.s32.totalorder %s21, 1
      %p88 = por %p86, %p87
      %p89 = scmp.ne.s32.totalorder %s78, %s79
      %p90 = scmp.eq.s32.totalorder %s21, 0
      %p91 = por %p89, %p90
      %p92 = scmp.ne.s32.totalorder %s78, %s79
      %p93 = scmp.eq.s32.totalorder %s22, 1
      %p94 = por %p92, %p93
      %p96 = scmp.ne.s32.totalorder %s79, %s95
      %p97 = scmp.eq.s32.totalorder %s22, 0
      %p98 = por %p96, %p97
      %s99 = ssub.s32 %s24, %s38
      %p100 = scmp.eq.s32.totalorder %s99, 0
      %s102 = sadd.s32 %s101, 1
      %s103 = scalar_select %p100, %s101, %s102
      %p106 = pneg %p100
      %p107 = scmp.eq.s32.totalorder %s16, 1
      %p108 = por %p106, %p107
      %p109 = scmp.ne.s32.totalorder %s101, %s104
      %p110 = scmp.eq.s32.totalorder %s16, 0
      %p111 = por %p109, %p110
      %p112 = scmp.ne.s32.totalorder %s101, %s104
      %p113 = scmp.eq.s32.totalorder %s21, 1
      %p114 = por %p112, %p113
      %p115 = scmp.ne.s32.totalorder %s104, %s105
      %p116 = scmp.eq.s32.totalorder %s21, 0
      %p117 = por %p115, %p116
      %p118 = scmp.ne.s32.totalorder %s104, %s105
      %p119 = scmp.eq.s32.totalorder %s22, 1
      %p120 = por %p118, %p119
      %p122 = scmp.ne.s32.totalorder %s105, %s121
      %p123 = scmp.eq.s32.totalorder %s22, 0
      %p124 = por %p122, %p123
      %s125 = ssub.s32 %s23, %s42
      %s126 = ssub.s32 %s24, %s38
      %s127 = sor.u32 %s125, %s126
      %p128 = scmp.eq.s32.totalorder %s127, 0
      %s130 = sadd.s32 %s129, 1
      %s131 = scalar_select %p128, %s129, %s130
      %p134 = pneg %p128
      %p135 = scmp.eq.s32.totalorder %s16, 1
      %p136 = por %p134, %p135
      %p137 = scmp.ne.s32.totalorder %s129, %s132
      %p138 = scmp.eq.s32.totalorder %s16, 0
      %p139 = por %p137, %p138
      %p140 = scmp.ne.s32.totalorder %s129, %s132
      %p141 = scmp.eq.s32.totalorder %s21, 1
      %p142 = por %p140, %p141
      %p143 = scmp.ne.s32.totalorder %s132, %s133
      %p144 = scmp.eq.s32.totalorder %s21, 0
      %p145 = por %p143, %p144
      %p146 = scmp.ne.s32.totalorder %s132, %s133
      %p147 = scmp.eq.s32.totalorder %s22, 1
      %p148 = por %p146, %p147
      %p150 = scmp.ne.s32.totalorder %s133, %s149
      %p151 = scmp.eq.s32.totalorder %s22, 0
      %p152 = por %p150, %p151
      %p153 = scmp.le.s32.totalorder 1, %s16
      %p154 = scmp.lt.s32.totalorder %s16, 3
      %p155 = pnand %p153, %p154
      %p156 = pneg %p155
      // Predicated region
      $region9: #{tpu_custom_call.1} parent=5 // pred_check
        _
      $region10: #{tpu_custom_call.1} parent=5 // pred_check_branch
        %158 = sbr.rel (%p155) target = $region12
      $region11: #{tpu_custom_call.1} parent=5 // pred_region
        %s159 = ssub.s32 %s16, 1
        // Predicated region
        $region13: #{tpu_custom_call.1} parent=11 // pred_check
          %p160 = pneg %p63
        $region14: #{tpu_custom_call.1} parent=11 // pred_check_branch
          %162 = sbr.rel (%p160) target = $region16
        $region15: #{tpu_custom_call.1} parent=11 // pred_region
          %s163 = smul.u32 2, %s26
          %s164 = smul.u32 2, %s28
          %166 = vsyncadd [#allocation4], 0
          %s167 = smul.addr %s163, 2
          %s168 = sadd.s32 %s164, %s167
          %s169 = smul.addr %s168, 8
          %s170 = scalar_lea.hbm %s0, %s169
          %s171 = sshll.u32 %s170, 4
          %s172 = int_to_ptr.hbm [resolvable:$true] %s171
          %s173 = sshll.u32 [#allocation3], 4
          %s174 = int_to_ptr.vmem [resolvable:$true] %s173
          %179 = dma.hbm_to_vmem [thread:$0]  %s172, 512, %s174, [#allocation4], 256, 256, 16
        $region16: #{tpu_custom_call.1} parent=11 // pred_fallthru
          _
      $region12: #{tpu_custom_call.1} parent=5 // pred_fallthru
        _
      %p180 = scmp.lt.s32.totalorder %s16, 2
      // Predicated region
      $region17: #{tpu_custom_call.1} parent=5 // pred_check
        %p181 = pneg %p180
      $region18: #{tpu_custom_call.1} parent=5 // pred_check_branch
        %183 = sbr.rel (%p181) target = $region20
      $region19: #{tpu_custom_call.1} parent=5 // pred_region
        // Predicated region
        $region21: #{tpu_custom_call.1} parent=19 // pred_check
          %p184 = pneg %p85
        $region22: #{tpu_custom_call.1} parent=19 // pred_check_branch
          %186 = sbr.rel (%p184) target = $region24
        $region23: #{tpu_custom_call.1} parent=19 // pred_region
          %s187 = sand.u32 %s16, 1
          %s188 = scalar_lea.sflag [#allocation7], %s187
          %s189 = sand.u32 %s75, 1
          %s190 = smul.addr %s189, 256
          %s191 = scalar_lea.vmem [#allocation6], %s190
          %s192 = smul.u32 32, %s25
          %194 = vsyncadd %s188, 0
          %s195 = smul.addr %s192, 2
          %s196 = sadd.s32 %s24, %s195
          %s197 = smul.addr %s196, 8
          %s198 = scalar_lea.hbm %s1, %s197
          %s199 = sshll.u32 %s198, 4
          %s200 = int_to_ptr.hbm [resolvable:$true] %s199
          %s201 = sshll.u32 %s191, 4
          %s202 = int_to_ptr.vmem [resolvable:$true] %s201
          %207 = dma.hbm_to_vmem [thread:$0]  %s200, 4096, %s202, %s188, 256, 128, 8
        $region24: #{tpu_custom_call.1} parent=19 // pred_fallthru
          _
        // Predicated region
        $region25: #{tpu_custom_call.1} parent=19 // pred_check
          %p208 = pneg %p111
        $region26: #{tpu_custom_call.1} parent=19 // pred_check_branch
          %210 = sbr.rel (%p208) target = $region28
        $region27: #{tpu_custom_call.1} parent=19 // pred_region
          %s211 = sand.u32 %s16, 1
          %s212 = scalar_lea.sflag [#allocation7], %s211
          %s213 = sand.u32 %s101, 1
          %s214 = scalar_lea.vmem [#allocation8], %s213
          %216 = vsyncadd %s212, 0
          %s217 = scalar_lea.hbm %s2, %s24
          %s219 = sshll.u32 %s217, 4
          %s220 = int_to_ptr.hbm [resolvable:$true] %s219
          %s221 = sshll.u32 %s214, 4
          %s222 = int_to_ptr.vmem [resolvable:$true] %s221
          %224 = dma.hbm_to_vmem [thread:$0]  %s220, 16, %s222, %s212
        $region28: #{tpu_custom_call.1} parent=19 // pred_fallthru
          _
      $region20: #{tpu_custom_call.1} parent=5 // pred_fallthru
        _
      %p225 = scmp.le.s32.totalorder 1, %s16
      %p226 = scmp.lt.s32.totalorder %s16, 3
      %p227 = pnand %p225, %p226
      %p228 = pneg %p227
      // Predicated region
      $region29: #{tpu_custom_call.1} parent=5 // pred_check
        _
      $region30: #{tpu_custom_call.1} parent=5 // pred_check_branch
        %230 = sbr.rel (%p227) target = $region32
      $region31: #{tpu_custom_call.1} parent=5 // pred_region
        %s231 = ssub.s32 %s16, 1
        // Predicated region
        $region33: #{tpu_custom_call.1} parent=31 // pred_check
          %p232 = pneg %p63
        $region34: #{tpu_custom_call.1} parent=31 // pred_check_branch
          %234 = sbr.rel (%p232) target = $region36
        $region35: #{tpu_custom_call.1} parent=31 // pred_region
          %236 = dma.done [#allocation4], 512
        $region36: #{tpu_custom_call.1} parent=31 // pred_fallthru
          _
        %s237 = sand.u32 %s21, 1
        %s238 = scalar_lea.sflag [#allocation7], %s237
        %s239 = sand.u32 %s78, 1
        %s240 = smul.addr %s239, 256
        %s241 = scalar_lea.vmem [#allocation6], %s240
        // Predicated region
        $region37: #{tpu_custom_call.1} parent=31 // pred_check
          %p242 = pneg %p91
        $region38: #{tpu_custom_call.1} parent=31 // pred_check_branch
          %244 = sbr.rel (%p242) target = $region40
        $region39: #{tpu_custom_call.1} parent=31 // pred_region
          %246 = dma.done %s238, 4096
        $region40: #{tpu_custom_call.1} parent=31 // pred_fallthru
          _
        %s247 = sand.u32 %s21, 1
        %s248 = scalar_lea.sflag [#allocation7], %s247
        %s249 = sand.u32 %s104, 1
        %s250 = scalar_lea.vmem [#allocation8], %s249
        // Predicated region
        $region41: #{tpu_custom_call.1} parent=31 // pred_check
          %p251 = pneg %p117
        $region42: #{tpu_custom_call.1} parent=31 // pred_check_branch
          %253 = sbr.rel (%p251) target = $region44
        $region43: #{tpu_custom_call.1} parent=31 // pred_region
          %255 = dma.done %s248, 16
        $region44: #{tpu_custom_call.1} parent=31 // pred_fallthru
          _
        %p256 = pneg %p63
        %p257 = pneg %p60
        %s258 = sand.u32 %s21, 1
        %s259 = scalar_lea.sflag [#allocation7], %s258
        %s260 = sand.u32 %s78, 1
        %s261 = smul.addr %s260, 256
        %s262 = scalar_lea.vmem [#allocation6], %s261
        %p263 = pneg %p91
        %p264 = pneg %p88
        %s265 = sand.u32 %s21, 1
        %s266 = scalar_lea.sflag [#allocation7], %s265
        %s267 = sand.u32 %s104, 1
        %s268 = scalar_lea.vmem [#allocation8], %s267
        %p269 = pneg %p117
        %p270 = pneg %p114
        %p271 = pneg %p145
        %p272 = pneg %p142
        %s273 = sand.u32 %s132, 1
        %s274 = scalar_lea.sflag [#allocation5], %s273
        %s275 = sand.u32 %s132, 1
        %s276 = smul.addr %s275, 16
        %s277 = scalar_lea.vmem [#allocation9], %s276
        %s278 = smul.u32 2, %s26
        %s279 = smul.u32 2, %s28
        %s280 = smul.u32 32, %s28
        %s281 = smul.u32 2, %s26
        %p282 = scmp.eq.s32.totalorder %s28, 0
        // Predicated region
        $region45: #{tpu_custom_call.1} parent=31 // pred_check
          %p283 = pneg %p282
        $region46: #{tpu_custom_call.1} parent=31 // pred_check_branch
          %285 = sbr.rel (%p283) target = $region48
        $region47: #{tpu_custom_call.1} parent=31 // pred_region
          %286 = vst [vmem:[#allocation2] sm:$0xff] 0.0
          %287 = vst [vmem:[#allocation2 + $0x8] sm:$0xff] 0.0
        $region48: #{tpu_custom_call.1} parent=31 // pred_fallthru
          _
        %v288 = vld [vmem:[#allocation2] sm:$0xff]
        %v289 = vld [vmem:[#allocation2 + $0x8] sm:$0xff]
        %v290 = vld [vmem:[#allocation3] sm:$0xff]
        %v291 = vld [vmem:[#allocation3 + $0x8] sm:$0xff]
        %v292 = vld [vmem:[#allocation3 + $0x10] sm:$0xff]
        %v293 = vld [vmem:[#allocation3 + $0x18] sm:$0xff]
        %v294 = vld [vmem:[%s241] sm:$0xff]
        %v295 = vld [vmem:[%s241 + $0x8] sm:$0xff]
        %v296 = vld [vmem:[%s241 + $0x10] sm:$0xff]
        %v297 = vld [vmem:[%s241 + $0x18] sm:$0xff]
        %v298 = vld [vmem:[%s241 + $0x20] sm:$0xff]
        %v299 = vld [vmem:[%s241 + $0x28] sm:$0xff]
        %v300 = vld [vmem:[%s241 + $0x30] sm:$0xff]
        %v301 = vld [vmem:[%s241 + $0x38] sm:$0xff]
        %v302 = vld [vmem:[%s241 + $0x40] sm:$0xff]
        %v303 = vld [vmem:[%s241 + $0x48] sm:$0xff]
        %v304 = vld [vmem:[%s241 + $0x50] sm:$0xff]
        %v305 = vld [vmem:[%s241 + $0x58] sm:$0xff]
        %v306 = vld [vmem:[%s241 + $0x60] sm:$0xff]
        %v307 = vld [vmem:[%s241 + $0x68] sm:$0xff]
        %v308 = vld [vmem:[%s241 + $0x70] sm:$0xff]
        %v309 = vld [vmem:[%s241 + $0x78] sm:$0xff]
        %v310 = vld [vmem:[%s241 + $0x80] sm:$0xff]
        %v311 = vld [vmem:[%s241 + $0x88] sm:$0xff]
        %v312 = vld [vmem:[%s241 + $0x90] sm:$0xff]
        %v313 = vld [vmem:[%s241 + $0x98] sm:$0xff]
        %v314 = vld [vmem:[%s241 + $0xa0] sm:$0xff]
        %v315 = vld [vmem:[%s241 + $0xa8] sm:$0xff]
        %v316 = vld [vmem:[%s241 + $0xb0] sm:$0xff]
        %v317 = vld [vmem:[%s241 + $0xb8] sm:$0xff]
        %v318 = vld [vmem:[%s241 + $0xc0] sm:$0xff]
        %v319 = vld [vmem:[%s241 + $0xc8] sm:$0xff]
        %v320 = vld [vmem:[%s241 + $0xd0] sm:$0xff]
        %v321 = vld [vmem:[%s241 + $0xd8] sm:$0xff]
        %v322 = vld [vmem:[%s241 + $0xe0] sm:$0xff]
        %v323 = vld [vmem:[%s241 + $0xe8] sm:$0xff]
        %v324 = vld [vmem:[%s241 + $0xf0] sm:$0xff]
        %v325 = vld [vmem:[%s241 + $0xf8] sm:$0xff]
        %326 = vmatpush.msra.mxu0 %v309
        %327 = vmatpush.msra.mxu0 %v308
        %328 = vmatpush.msra.mxu0 %v307
        %329 = vmatpush.msra.mxu0 %v306
        %330 = vmatpush.msra.mxu0 %v305
        %331 = vmatpush.msra.mxu0 %v304
        %332 = vmatpush.msra.mxu0 %v303
        %333 = vmatpush.msra.mxu0 %v302
        %334 = vmatpush.msra.mxu0 %v301
        %335 = vmatpush.msra.mxu0 %v300
        %336 = vmatpush.msra.mxu0 %v299
        %337 = vmatpush.msra.mxu0 %v298
        %338 = vmatpush.msra.mxu0 %v297
        %339 = vmatpush.msra.mxu0 %v296
        %340 = vmatpush.msra.mxu0 %v295
        %341 = vmatpush.msra.mxu0 %v294
        %342 = vmatmul.f32.gmra.mxu0 %v290
        %v343 = vpop.f32.mrf.mxu0
        %v344 = vadd.f32 0.0, %v343
        %345 = vmatmul.f32.gmra.mxu0 %v292
        %v346 = vpop.f32.mrf.mxu0
        %v347 = vadd.f32 0.0, %v346
        %348 = vdwg.mxu0
        %349 = vmatpush.msra.mxu0 %v325
        %350 = vmatpush.msra.mxu0 %v324
        %351 = vmatpush.msra.mxu0 %v323
        %352 = vmatpush.msra.mxu0 %v322
        %353 = vmatpush.msra.mxu0 %v321
        %354 = vmatpush.msra.mxu0 %v320
        %355 = vmatpush.msra.mxu0 %v319
        %356 = vmatpush.msra.mxu0 %v318
        %357 = vmatpush.msra.mxu0 %v317
        %358 = vmatpush.msra.mxu0 %v316
        %359 = vmatpush.msra.mxu0 %v315
        %360 = vmatpush.msra.mxu0 %v314
        %361 = vmatpush.msra.mxu0 %v313
        %362 = vmatpush.msra.mxu0 %v312
        %363 = vmatpush.msra.mxu0 %v311
        %364 = vmatpush.msra.mxu0 %v310
        %365 = vmatmul.f32.gmra.mxu0 %v291
        %v366 = vpop.f32.mrf.mxu0
        %v367 = vadd.f32 %v344, %v366
        %368 = vmatmul.f32.gmra.mxu0 %v293
        %v369 = vpop.f32.mrf.mxu0
        %v370 = vadd.f32 %v347, %v369
        %371 = vdwg.mxu0
        %v372 = vadd.f32 %v288, %v367
        %v373 = vadd.f32 %v289, %v370
        %374 = vst [vmem:[#allocation2] sm:$0xff] %v372
        %375 = vst [vmem:[#allocation2 + $0x8] sm:$0xff] %v373
        // Predicated region
        $region49: #{tpu_custom_call.1} parent=31 // pred_check
          %p376 = pneg %p282
        $region50: #{tpu_custom_call.1} parent=31 // pred_check_branch
          %378 = sbr.rel (%p376) target = $region52
        $region51: #{tpu_custom_call.1} parent=31 // pred_region
          %v379 = vld [vmem:[#allocation2] sm:$0xff]
          %v380 = vld [vmem:[#allocation2 + $0x8] sm:$0xff]
          %v381 = vld [vmem:[%s250] sm:$0x1]
          %v383 = vperm.slane %v381, 0
          %v385 = vadd.f32 %v379, %v383
          %v386 = vadd.f32 %v380, %v383
          %387 = vst [vmem:[%s277] sm:$0xff] %v385
          %388 = vst [vmem:[%s277 + $0x8] sm:$0xff] %v386
        $region52: #{tpu_custom_call.1} parent=31 // pred_fallthru
          _
        %s389 = sand.u32 %s132, 1
        %s390 = scalar_lea.sflag [#allocation5], %s389
        %s391 = sand.u32 %s132, 1
        %s392 = smul.addr %s391, 16
        %s393 = scalar_lea.vmem [#allocation9], %s392
        // Predicated region
        $region53: #{tpu_custom_call.1} parent=31 // pred_check
          %p394 = pneg %p142
        $region54: #{tpu_custom_call.1} parent=31 // pred_check_branch
          %396 = sbr.rel (%p394) target = $region56
        $region55: #{tpu_custom_call.1} parent=31 // pred_region
          %s397 = smul.u32 2, %s26
          %399 = vsyncadd %s390, 0
          %s400 = smul.addr %s397, 2
          %s401 = sadd.s32 %s27, %s400
          %s402 = smul.addr %s401, 8
          %s403 = scalar_lea.hbm %s3, %s402
          %s404 = sshll.u32 %s393, 4
          %s405 = int_to_ptr.vmem [resolvable:$true] %s404
          %s406 = sshll.u32 %s403, 4
          %s407 = int_to_ptr.hbm [resolvable:$true] %s406
          %412 = dma.vmem_to_hbm [thread:$0]  %s405, 256, %s407, %s390, 128, 256, 8
        $region56: #{tpu_custom_call.1} parent=31 // pred_fallthru
          _
      $region32: #{tpu_custom_call.1} parent=5 // pred_fallthru
        _
      %p413 = scmp.le.s32.totalorder 2, %s16
      // Predicated region
      $region57: #{tpu_custom_call.1} parent=5 // pred_check
        %p414 = pneg %p413
      $region58: #{tpu_custom_call.1} parent=5 // pred_check_branch
        %416 = sbr.rel (%p414) target = $region60
      $region59: #{tpu_custom_call.1} parent=5 // pred_region
        %s417 = ssub.s32 %s16, 2
        // Predicated region
        $region61: #{tpu_custom_call.1} parent=59 // pred_check
          %p418 = pneg %p148
        $region62: #{tpu_custom_call.1} parent=59 // pred_check_branch
          %420 = sbr.rel (%p418) target = $region64
        $region63: #{tpu_custom_call.1} parent=59 // pred_region
          %s421 = sand.u32 %s133, 1
          %s422 = scalar_lea.sflag [#allocation5], %s421
          %s423 = sand.u32 %s133, 1
          %s424 = smul.addr %s423, 16
          %s425 = scalar_lea.vmem [#allocation9], %s424
          %427 = dma.done %s422, 256
        $region64: #{tpu_custom_call.1} parent=59 // pred_fallthru
          _
      $region60: #{tpu_custom_call.1} parent=5 // pred_fallthru
        _
    $region6: #{tpu_custom_call.1} parent=1 // loop_footer
      %s20 = sadd.s32 1, %s16
    $region7: #{tpu_custom_call.1} parent=1 // loop_footer_branch
      %15 = sbr.rel target = $region3
    $region8: #{tpu_custom_call.1} parent=1 // loop_exit
      _
    %428 = vsyncpa [#allocation4], 1
    %s429 = scalar_lea.sflag [#allocation4], 1
    %430 = vsyncpa %s429, 1
    %431 = vsyncpa [#allocation7], 1
    %s432 = scalar_lea.sflag [#allocation7], 1
    %433 = vsyncpa %s432, 1
    %434 = vsyncpa [#allocation5], 1
    %s435 = scalar_lea.sflag [#allocation5], 1
    %436 = vsyncpa %s435, 1

</llo_original>
